<compile_context>
chip_gen: v6e
topology: v6e:2x2x1
jax: 0.10.0
libtpu: 0.0.40
codegen_flags: <defaults>
</compile_context>

<pallas_src>
import math

import jax
import jax.numpy as jnp
from jax.experimental import pallas as pl
from jax.experimental.pallas import tpu as pltpu

_GELU_K = 2.0 * 0.7978845608028654  # 2*sqrt(2/pi); 0.5*(1+tanh(z)) == sigmoid(2z)


def _gelu_tanh(h):
    # 0.5*h*(1+tanh(c*(h+0.044715 h^3))) == h * sigmoid(2c*(h + 0.044715 h^3))
    return h * jax.nn.sigmoid(_GELU_K * (h * (1.0 + 0.044715 * (h * h))))


def _mlp_kernel_f32_out(x_ref, w1_ref, b1_ref, w2_ref, b2_ref, o_ref):
    """One (tm, C) row tile; reduces over hidden dim H in tn-wide slabs.

    f32-output fast path: the output tile is resident across the H grid axis
    (index_map returns (i, 0) for every j), so it doubles as the accumulator.

      x_ref : (tm, C)  activations, bf16
      w1_ref: (C, tn)  c_fc weight slab, (in, out) layout, bf16
      b1_ref: (1, tn)  c_fc bias slab, f32
      w2_ref: (tn, C)  c_proj weight slab, (in, out) layout, bf16
      b2_ref: (1, C)   c_proj bias, f32
      o_ref : (tm, C)  f32 output tile / accumulator
    """
    j = pl.program_id(1)

    @pl.when(j == 0)
    def _():
        o_ref[...] = jnp.broadcast_to(b2_ref[...], o_ref.shape)

    # c_fc slab: (tm, C) x (C, tn) -> (tm, tn). MXU-native feed, f32 accumulation.
    h = jnp.dot(x_ref[...], w1_ref[...],
                preferred_element_type=jnp.float32) + b1_ref[...]
    g = _gelu_tanh(h)
    # Partial c_proj: (tm, tn) x (tn, C) -> (tm, C), accumulated over H slabs.
    o_ref[...] += jnp.dot(g.astype(jnp.bfloat16), w2_ref[...],
                          preferred_element_type=jnp.float32)


def _mlp_kernel_acc(x_ref, w1_ref, b1_ref, w2_ref, b2_ref, o_ref, acc_ref):
    """Same computation, with an f32 VMEM accumulator for non-f32 outputs."""
    j = pl.program_id(1)

    @pl.when(j == 0)
    def _():
        acc_ref[...] = jnp.broadcast_to(b2_ref[...], acc_ref.shape)

    h = jnp.dot(x_ref[...], w1_ref[...],
                preferred_element_type=jnp.float32) + b1_ref[...]
    g = _gelu_tanh(h)
    acc_ref[...] += jnp.dot(g.astype(jnp.bfloat16), w2_ref[...],
                            preferred_element_type=jnp.float32)

    @pl.when(j == pl.num_programs(1) - 1)
    def _():
        o_ref[...] = acc_ref[...].astype(o_ref.dtype)


# ----------------------------------------------------------------------------
# Wrapper: tiling / VMEM sizing helpers
# ----------------------------------------------------------------------------

def _cdiv(a, b):
    return -(-a // b)


def _round_up(v, m):
    return _cdiv(v, m) * m


def _vmem_capacity_bytes():
    """Physical VMEM per TensorCore; conservative 64 MiB (v7x) if unknown."""
    try:
        cap = int(getattr(pltpu.get_tpu_info(), "vmem_capacity_bytes", 0))
        if cap > 0:
            return cap
    except Exception:
        pass
    return 64 << 20


def _vmem_estimate(tm, tn, C, out_itemsize, use_acc):
    """Live VMEM for one grid step (double-buffered tiles + temporaries)."""
    est = (2 * tm * C * 2                      # x tile, bf16, 2 buffers
           + 2 * C * tn * 2                    # W1^T slab, bf16, 2 buffers
           + 2 * tn * C * 2                    # W2^T slab, bf16, 2 buffers
           + 2 * 8 * tn * 4                    # b1 slab (sublane-padded)
           + 2 * 8 * C * 4                     # b2
           + 2 * tm * C * out_itemsize         # output tile, 2 buffers
           + (tm * C * 4 if use_acc else 0)    # f32 accumulator scratch
           + 3 * tm * tn * 4)                  # h / g f32 temporaries
    return est + (6 << 20)                     # Mosaic internal-scratch headroom


def _tn_candidates(H):
    cands = [t for t in (2048, 1024, 512, 256, 128) if t <= H and H % t == 0]
    # TODO(synk): for a huge H with no multiple-of-128 divisor, pad H with zero
    # weight columns instead of falling back to a single full-H slab.
    return cands or [H]


def _choose_tiles(M, C, H, out_itemsize, use_acc, budget):
    """Largest row tile (priority: cuts weight re-streaming), then largest tn."""
    m8 = max(8, _round_up(M, 8))
    tm_cands = [t for t in (1024, 512, 256, 128, 64, 32, 16, 8) if t <= m8]
    if m8 < 1024:
        tm_cands = sorted(set(tm_cands) | {m8}, reverse=True)
    tn_cands = _tn_candidates(H)

    for tm in tm_cands:
        for tn in tn_cands:
            if _vmem_estimate(tm, tn, C, out_itemsize, use_acc) <= budget:
                return tm, tn
    return tm_cands[-1], tn_cands[-1]   # nothing fits cleanly: smallest tiles


def prepare_mlp_params(w_fc, b_fc, w_proj, b_proj):
    """One-time prep: transpose torch (out, in) weights to MXU-friendly (in, out)
    layout and cast to bf16; biases stay f32.  Cache these across forward calls."""
    w1 = jnp.asarray(w_fc).T.astype(jnp.bfloat16)     # (C, H)
    w2 = jnp.asarray(w_proj).T.astype(jnp.bfloat16)   # (H, C)
    b1 = jnp.asarray(b_fc).reshape(1, -1).astype(jnp.float32)    # (1, H)
    b2 = jnp.asarray(b_proj).reshape(1, -1).astype(jnp.float32)  # (1, C)
    return w1, b1, w2, b2


def mlp_pallas(x, w1, b1, w2, b2):
    """x: (B, T, C).  w1: (C, H) bf16, b1: (1, H) f32, w2: (H, C) bf16,
    b2: (1, C) f32 (from prepare_mlp_params).  Returns (B, T, C) in x.dtype."""
    B, T, C = x.shape
    Cw, H = w1.shape
    assert Cw == C and w2.shape == (H, C) and b1.shape == (1, H) and b2.shape == (1, C)
    M = B * T
    out_dtype = x.dtype
    out_itemsize = jnp.dtype(out_dtype).itemsize
    use_acc = jnp.dtype(out_dtype) != jnp.dtype(jnp.float32)

    # VMEM budget: never exceed ~85% of the physical per-core capacity
    # (64 MiB on v7x, 128 MiB on v5e/v6e).
    vmem_cap = _vmem_capacity_bytes()
    budget = min(int(0.85 * vmem_cap), vmem_cap - (8 << 20))

    tm, tn = _choose_tiles(M, C, H, out_itemsize, use_acc, budget)

    # v7x has 2 TensorCores: keep >= 2 blocks on the parallel row axis when the
    # row count allows a split.
    if _cdiv(M, tm) < 2 and M >= 16:
        tm = max(8, _round_up(_cdiv(M, 2), 8))

    n_m = _cdiv(M, tm)
    Mp = n_m * tm
    n_h = _cdiv(H, tn)

    # Cast activations to bf16 once in the wrapper (the kernel never re-casts).
    x2 = x.reshape(M, C).astype(jnp.bfloat16)
    if Mp != M:
        x2 = jnp.pad(x2, ((0, Mp - M), (0, 0)))

    est = _vmem_estimate(tm, tn, C, out_itemsize, use_acc)
    vmem_limit = int(min(max(est, 32 << 20), budget))

    kernel = _mlp_kernel_acc if use_acc else _mlp_kernel_f32_out
    scratch = [pltpu.VMEM((tm, C), jnp.float32)] if use_acc else []

    out = pl.pallas_call(
        kernel,
        out_shape=jax.ShapeDtypeStruct((Mp, C), out_dtype),
        grid_spec=pltpu.PrefetchScalarGridSpec(
            num_scalar_prefetch=0,
            grid=(n_m, n_h),                          # rows parallel, H reduction last
            in_specs=[
                pl.BlockSpec((tm, C), lambda i, j: (i, 0)),   # x tile (bf16)
                pl.BlockSpec((C, tn), lambda i, j: (0, j)),   # W1^T slab (bf16)
                pl.BlockSpec((1, tn), lambda i, j: (0, j)),   # b1 slab (f32)
                pl.BlockSpec((tn, C), lambda i, j: (j, 0)),   # W2^T slab (bf16)
                pl.BlockSpec((1, C), lambda i, j: (0, 0)),    # b2 (f32)
            ],
            out_specs=pl.BlockSpec((tm, C), lambda i, j: (i, 0)),
            scratch_shapes=tuple(scratch),
        ),
        compiler_params=pltpu.CompilerParams(
            dimension_semantics=("parallel", "arbitrary"),
            vmem_limit_bytes=vmem_limit),
    )(x2, w1, b1, w2, b2)

    if Mp != M:
        out = out[:M]
    return out.reshape(B, T, C)


def mlp_reference(x, w_fc, b_fc, w_proj, b_proj):
    h = jnp.einsum("btc,hc->bth", x, w_fc) + b_fc
    c = math.sqrt(2.0 / math.pi)
    g = 0.5 * h * (1.0 + jnp.tanh(c * (h + 0.044715 * h ** 3)))
    return jnp.einsum("bth,ch->btc", g, w_proj) + b_proj


if __name__ == "__main__":
    B, T, C = 2, 8, 32            # batch, seq, n_embd
    H = 4 * C

    key = jax.random.PRNGKey(0)
    kx, k1, k2, k3, k4 = jax.random.split(key, 5)

    x = jax.random.normal(kx, (B, T, C), dtype=jnp.float32)
    # nn.Linear layouts: weight (out, in), bias (out,)
    w_fc = jax.random.normal(k1, (H, C), dtype=jnp.float32) * (1.0 / math.sqrt(C))
    b_fc = jax.random.normal(k2, (H,), dtype=jnp.float32) * 0.02
    w_proj = jax.random.normal(k3, (C, H), dtype=jnp.float32) * (1.0 / math.sqrt(H))
    b_proj = jax.random.normal(k4, (C,), dtype=jnp.float32) * 0.02

    # One-time weight prep (transpose + bf16 cast) hoisted out of the per-call path.
    params = prepare_mlp_params(w_fc, b_fc, w_proj, b_proj)

    y = mlp_pallas(x, *params)
    y = jax.block_until_ready(y)

    y_ref = mlp_reference(x, w_fc, b_fc, w_proj, b_proj)
    # bf16 MXU inputs with f32 accumulation -> loosened tolerance vs f32 ref.
    assert jnp.allclose(y, y_ref, atol=5e-2, rtol=5e-2), "mismatch vs reference"

    print("KERNEL_OK")
</pallas_src>

<mosaic_0001>
module attributes {stable_mosaic.version = 11 : i64} {
  func.func @_mlp_kernel_f32_out(%arg0: i32, %arg1: i32, %arg2: memref<8x32xbf16, #tpu.memory_space<vmem>>, %arg3: memref<32x128xbf16, #tpu.memory_space<vmem>>, %arg4: memref<1x128xf32, #tpu.memory_space<vmem>>, %arg5: memref<128x32xbf16, #tpu.memory_space<vmem>>, %arg6: memref<1x32xf32, #tpu.memory_space<vmem>>, %arg7: memref<8x32xf32, #tpu.memory_space<vmem>>) attributes {dimension_semantics = [#tpu.dimension_semantics<parallel>, #tpu.dimension_semantics<arbitrary>], iteration_bounds = array<i64: 2, 1>, scalar_prefetch = 0 : i64, scratch_operands = 0 : i64, tpu.core_type = #tpu.core_type<tc>, window_params = [{transform_indices = @transform_0, window_bounds = array<i64: 8, 32>}, {transform_indices = @transform_1, window_bounds = array<i64: 32, 128>}, {transform_indices = @transform_2, window_bounds = array<i64: 1, 128>}, {transform_indices = @transform_3, window_bounds = array<i64: 128, 32>}, {pipeline_mode = #tpu.pipeline_mode<synchronous>, transform_indices = @transform_4, window_bounds = array<i64: 1, 32>}, {transform_indices = @transform_5, window_bounds = array<i64: 8, 32>}]} {
    %c0_i32 = arith.constant 0 : i32
    %0 = arith.cmpi eq, %arg1, %c0_i32 : i32
    %1 = arith.extui %0 : i1 to i32
    %c0_i32_0 = arith.constant 0 : i32
    %2 = arith.cmpi ne, %1, %c0_i32_0 : i32
    scf.if %2 {
      %c0_17 = arith.constant 0 : index
      %c0_18 = arith.constant 0 : index
      %29 = vector.load %arg6[%c0_17, %c0_18] : memref<1x32xf32, #tpu.memory_space<vmem>>, vector<1x32xf32>
      %30 = vector.shape_cast %29 : vector<1x32xf32> to vector<1x32xf32>
      %31 = vector.broadcast %30 : vector<1x32xf32> to vector<8x32xf32>
      %c0_19 = arith.constant 0 : index
      %c0_20 = arith.constant 0 : index
      %32 = vector.load %arg7[%c0_19, %c0_20] : memref<8x32xf32, #tpu.memory_space<vmem>>, vector<8x32xf32>
      tpu.vector_store %arg7[%c0_19, %c0_20], %31 {strides = array<i32>} : memref<8x32xf32, #tpu.memory_space<vmem>>, vector<8x32xf32>,
    } else {
    }
    %c0 = arith.constant 0 : index
    %c0_1 = arith.constant 0 : index
    %3 = vector.load %arg2[%c0, %c0_1] : memref<8x32xbf16, #tpu.memory_space<vmem>>, vector<8x32xbf16>
    %c0_2 = arith.constant 0 : index
    %c0_3 = arith.constant 0 : index
    %4 = vector.load %arg3[%c0_2, %c0_3] : memref<32x128xbf16, #tpu.memory_space<vmem>>, vector<32x128xbf16>
    %cst = arith.constant dense<0.000000e+00> : vector<8x128xf32>
    %5 = tpu.matmul %3, %4, %cst {dimension_numbers = #tpu.dot_dimension_numbers<[1], [0], [0], [1], [0, 0, 1, 1], [], []>} : vector<8x32xbf16>, vector<32x128xbf16>, vector<8x128xf32> -> vector<8x128xf32>
    %c0_4 = arith.constant 0 : index
    %c0_5 = arith.constant 0 : index
    %6 = vector.load %arg4[%c0_4, %c0_5] : memref<1x128xf32, #tpu.memory_space<vmem>>, vector<1x128xf32>
    %7 = vector.broadcast %6 : vector<1x128xf32> to vector<8x128xf32>
    %8 = arith.addf %5, %7 : vector<8x128xf32>
    %9 = arith.mulf %8, %8 : vector<8x128xf32>
    %cst_6 = arith.constant 4.471500e-02 : f32
    %10 = vector.broadcast %cst_6 : f32 to vector<8x128xf32>
    %11 = arith.mulf %10, %9 : vector<8x128xf32>
    %cst_7 = arith.constant 1.000000e+00 : f32
    %12 = vector.broadcast %cst_7 : f32 to vector<8x128xf32>
    %13 = arith.addf %12, %11 : vector<8x128xf32>
    %14 = arith.mulf %8, %13 : vector<8x128xf32>
    %cst_8 = arith.constant 1.59576917 : f32
    %15 = vector.broadcast %cst_8 : f32 to vector<8x128xf32>
    %16 = arith.mulf %15, %14 : vector<8x128xf32>
    %17 = arith.negf %16 : vector<8x128xf32>
    %18 = math.exp %17 : vector<8x128xf32>
    %cst_9 = arith.constant 1.000000e+00 : f32
    %19 = vector.broadcast %cst_9 : f32 to vector<8x128xf32>
    %20 = arith.addf %19, %18 : vector<8x128xf32>
    %21 = arith.divf %19, %20 : vector<8x128xf32>
    %22 = arith.mulf %8, %21 : vector<8x128xf32>
    %c0_10 = arith.constant 0 : index
    %c0_11 = arith.constant 0 : index
    %23 = vector.load %arg7[%c0_10, %c0_11] : memref<8x32xf32, #tpu.memory_space<vmem>>, vector<8x32xf32>
    %24 = arith.truncf %22 : vector<8x128xf32> to vector<8x128xbf16>
    %c0_12 = arith.constant 0 : index
    %c0_13 = arith.constant 0 : index
    %25 = vector.load %arg5[%c0_12, %c0_13] : memref<128x32xbf16, #tpu.memory_space<vmem>>, vector<128x32xbf16>
    %cst_14 = arith.constant dense<0.000000e+00> : vector<8x32xf32>
    %26 = tpu.matmul %24, %25, %cst_14 {dimension_numbers = #tpu.dot_dimension_numbers<[1], [0], [0], [1], [0, 0, 1, 1], [], []>} : vector<8x128xbf16>, vector<128x32xbf16>, vector<8x32xf32> -> vector<8x32xf32>
    %27 = arith.addf %23, %26 : vector<8x32xf32>
    %c0_15 = arith.constant 0 : index
    %c0_16 = arith.constant 0 : index
    %28 = vector.load %arg7[%c0_15, %c0_16] : memref<8x32xf32, #tpu.memory_space<vmem>>, vector<8x32xf32>
    tpu.vector_store %arg7[%c0_15, %c0_16], %27 {strides = array<i32>} : memref<8x32xf32, #tpu.memory_space<vmem>>, vector<8x32xf32>,
    return
  }
  func.func @transform_0(%arg0: i32, %arg1: i32) -> (i32, i32) {
    %c0_i32 = arith.constant 0 : i32
    %c0_i32_0 = arith.constant 0 : i32
    return %arg0, %c0_i32 : i32, i32
  }
  func.func @transform_1(%arg0: i32, %arg1: i32) -> (i32, i32) {
    %c0_i32 = arith.constant 0 : i32
    %c0_i32_0 = arith.constant 0 : i32
    return %c0_i32, %arg1 : i32, i32
  }
  func.func @transform_2(%arg0: i32, %arg1: i32) -> (i32, i32) {
    %c0_i32 = arith.constant 0 : i32
    %c0_i32_0 = arith.constant 0 : i32
    return %c0_i32, %arg1 : i32, i32
  }
  func.func @transform_3(%arg0: i32, %arg1: i32) -> (i32, i32) {
    %c0_i32 = arith.constant 0 : i32
    %c0_i32_0 = arith.constant 0 : i32
    return %arg1, %c0_i32 : i32, i32
  }
  func.func @transform_4(%arg0: i32, %arg1: i32) -> (i32, i32) {
    %c0_i32 = arith.constant 0 : i32
    %c0_i32_0 = arith.constant 0 : i32
    %c0_i32_1 = arith.constant 0 : i32
    return %c0_i32, %c0_i32_0 : i32, i32
  }
  func.func @transform_5(%arg0: i32, %arg1: i32) -> (i32, i32) {
    %c0_i32 = arith.constant 0 : i32
    %c0_i32_0 = arith.constant 0 : i32
    return %arg0, %c0_i32 : i32, i32
  }
}

</mosaic_0001>

<llo_original>
// kernel: tpu_custom_call.1
$region0: #{tpu_custom_call.1}
  #allocation0 [shape = 'u32[]', space=smem, size = 0x4, offset = 0x4, fixed_abs, tag = 'smem constant byte address 0x4 - core index']
  #allocation1 [shape = 'u32[144,128]{1,0:T(1,128)}', space=vmem, size = 0x12000, scoped, tag = 'internal scratch']
  %s0 = inlined_call_operand.vmem [shape: bf16[16,32], index: 0, kind: input, shape index: {}]
  %s1 = inlined_call_operand.vmem [shape: bf16[32,128], index: 1, kind: input, shape index: {}]
  %s2 = inlined_call_operand.vmem [shape: f32[1,128], index: 2, kind: input, shape index: {}]
  %s3 = inlined_call_operand.vmem [shape: bf16[128,32], index: 3, kind: input, shape index: {}]
  %s4 = inlined_call_operand.vmem [shape: f32[1,32], index: 4, kind: input, shape index: {}]
  %s5 = inlined_call_operand.hbm [shape: f32[16,32], index: 5, kind: output, shape index: {}]
  %s6 = sld [smem:[#allocation0]]
  $region57: #{tpu_custom_call.1} parent=0
    _
  %s8 = ssub.s32 1, %s6
  %s9 = scalar_select 0, %s8, %s6
  $region1: #{tpu_custom_call.1} parent=0
    #allocation2 [shape = 'u8[8192]{0}', space=vmem, size = 0x2000, scoped, tag = 'output window, operand 0']
    #allocation3 [shape = 's32[2]{0}', space=sflag, size = 0x8, scoped, tag = 'scoped memory for tpu_custom_call.1']
    %10 = vsyncpa [#allocation3], 0
    %s11 = scalar_lea.sflag [#allocation3], 1
    %12 = vsyncpa %s11, 0
    loop: start=0, step=1, limit=4
    $region2: #{tpu_custom_call.1} parent=1 // loop_pre_header
      _
    $region3: #{tpu_custom_call.1} parent=1 // loop_header
      %s14 = sphi 0, %s18
      %p15 = scmp.ge.s32.totalorder %s14, 4
      %s21 = sphi 0, %s33
      %s22 = sphi 0, %s29
      %s23 = sphi 0, %s21
      %s24 = sphi 0, %s22
      %s25 = sphi 0, %s23
      %s26 = sphi 0, %s24
      %s36 = sphi 0, %s38
      %s39 = sphi 0, %s36
      %s40 = sphi 0, %s39
      %s56 = sphi 0, %s40
      %s62 = sphi 0, %s64
      %s65 = sphi 0, %s62
      %s66 = sphi 0, %s65
      %s82 = sphi 0, %s66
      %s88 = sphi 0, %s90
      %s91 = sphi 0, %s88
      %s92 = sphi 0, %s91
      %s108 = sphi 0, %s92
      %s114 = sphi 0, %s116
      %s117 = sphi 0, %s114
      %s118 = sphi 0, %s117
      %s134 = sphi 0, %s118
      %s138 = sphi 0, %s138
      %s140 = sphi 0, %s138
      %s141 = sphi 0, %s140
      %s155 = sphi 0, %s141
      %s161 = sphi 0, %s163
      %s164 = sphi 0, %s161
      %s165 = sphi 0, %s164
      %s181 = sphi 0, %s165
    $region4: #{tpu_custom_call.1} parent=1 // loop_header_branch
      %17 = sbr.rel (%p15) target = $region8
    $region5: #{tpu_custom_call.1} parent=1 // loop_body
      %s19 = ssub.s32 %s14, 1
      %s20 = ssub.s32 %s14, 2
      %s27 = sadd.s32 1, %s22
      %p28 = scmp.ge.s32.totalorder %s27, 1
      %s29 = scalar_select %p28, 0, %s27
      %s30 = sadd.s32 1, %s21
      %s31 = scalar_select %p28, %s30, %s21
      %p32 = scmp.ge.s32.totalorder %s31, 2
      %s33 = scalar_select %p32, 0, %s31
      %s34 = ssub.s32 %s21, %s33
      %p35 = scmp.eq.s32.totalorder %s34, 0
      %s37 = sadd.s32 %s36, 1
      %s38 = scalar_select %p35, %s36, %s37
      %p41 = pneg %p35
      %p42 = scmp.eq.s32.totalorder %s14, 1
      %p43 = por %p41, %p42
      %p44 = scmp.ne.s32.totalorder %s36, %s39
      %p45 = scmp.eq.s32.totalorder %s14, 0
      %p46 = por %p44, %p45
      %p47 = scmp.ne.s32.totalorder %s36, %s39
      %p48 = scmp.eq.s32.totalorder %s19, 1
      %p49 = por %p47, %p48
      %p50 = scmp.ne.s32.totalorder %s39, %s40
      %p51 = scmp.eq.s32.totalorder %s19, 0
      %p52 = por %p50, %p51
      %p53 = scmp.ne.s32.totalorder %s39, %s40
      %p54 = scmp.eq.s32.totalorder %s20, 1
      %p55 = por %p53, %p54
      %p57 = scmp.ne.s32.totalorder %s40, %s56
      %p58 = scmp.eq.s32.totalorder %s20, 0
      %p59 = por %p57, %p58
      %s60 = ssub.s32 %s22, %s29
      %p61 = scmp.eq.s32.totalorder %s60, 0
      %s63 = sadd.s32 %s62, 1
      %s64 = scalar_select %p61, %s62, %s63
      %p67 = pneg %p61
      %p68 = scmp.eq.s32.totalorder %s14, 1
      %p69 = por %p67, %p68
      %p70 = scmp.ne.s32.totalorder %s62, %s65
      %p71 = scmp.eq.s32.totalorder %s14, 0
      %p72 = por %p70, %p71
      %p73 = scmp.ne.s32.totalorder %s62, %s65
      %p74 = scmp.eq.s32.totalorder %s19, 1
      %p75 = por %p73, %p74
      %p76 = scmp.ne.s32.totalorder %s65, %s66
      %p77 = scmp.eq.s32.totalorder %s19, 0
      %p78 = por %p76, %p77
      %p79 = scmp.ne.s32.totalorder %s65, %s66
      %p80 = scmp.eq.s32.totalorder %s20, 1
      %p81 = por %p79, %p80
      %p83 = scmp.ne.s32.totalorder %s66, %s82
      %p84 = scmp.eq.s32.totalorder %s20, 0
      %p85 = por %p83, %p84
      %s86 = ssub.s32 %s22, %s29
      %p87 = scmp.eq.s32.totalorder %s86, 0
      %s89 = sadd.s32 %s88, 1
      %s90 = scalar_select %p87, %s88, %s89
      %p93 = pneg %p87
      %p94 = scmp.eq.s32.totalorder %s14, 1
      %p95 = por %p93, %p94
      %p96 = scmp.ne.s32.totalorder %s88, %s91
      %p97 = scmp.eq.s32.totalorder %s14, 0
      %p98 = por %p96, %p97
      %p99 = scmp.ne.s32.totalorder %s88, %s91
      %p100 = scmp.eq.s32.totalorder %s19, 1
      %p101 = por %p99, %p100
      %p102 = scmp.ne.s32.totalorder %s91, %s92
      %p103 = scmp.eq.s32.totalorder %s19, 0
      %p104 = por %p102, %p103
      %p105 = scmp.ne.s32.totalorder %s91, %s92
      %p106 = scmp.eq.s32.totalorder %s20, 1
      %p107 = por %p105, %p106
      %p109 = scmp.ne.s32.totalorder %s92, %s108
      %p110 = scmp.eq.s32.totalorder %s20, 0
      %p111 = por %p109, %p110
      %s112 = ssub.s32 %s22, %s29
      %p113 = scmp.eq.s32.totalorder %s112, 0
      %s115 = sadd.s32 %s114, 1
      %s116 = scalar_select %p113, %s114, %s115
      %p119 = pneg %p113
      %p120 = scmp.eq.s32.totalorder %s14, 1
      %p121 = por %p119, %p120
      %p122 = scmp.ne.s32.totalorder %s114, %s117
      %p123 = scmp.eq.s32.totalorder %s14, 0
      %p124 = por %p122, %p123
      %p125 = scmp.ne.s32.totalorder %s114, %s117
      %p126 = scmp.eq.s32.totalorder %s19, 1
      %p127 = por %p125, %p126
      %p128 = scmp.ne.s32.totalorder %s117, %s118
      %p129 = scmp.eq.s32.totalorder %s19, 0
      %p130 = por %p128, %p129
      %p131 = scmp.ne.s32.totalorder %s117, %s118
      %p132 = scmp.eq.s32.totalorder %s20, 1
      %p133 = por %p131, %p132
      %p135 = scmp.ne.s32.totalorder %s118, %s134
      %p136 = scmp.eq.s32.totalorder %s20, 0
      %p137 = por %p135, %p136
      %s139 = sadd.s32 %s138, 1
      %p142 = scmp.eq.s32.totalorder %s14, 1
      %p143 = scmp.ne.s32.totalorder %s138, %s140
      %p144 = scmp.eq.s32.totalorder %s14, 0
      %p145 = por %p143, %p144
      %p146 = scmp.ne.s32.totalorder %s138, %s140
      %p147 = scmp.eq.s32.totalorder %s19, 1
      %p148 = por %p146, %p147
      %p149 = scmp.ne.s32.totalorder %s140, %s141
      %p150 = scmp.eq.s32.totalorder %s19, 0
      %p151 = por %p149, %p150
      %p152 = scmp.ne.s32.totalorder %s140, %s141
      %p153 = scmp.eq.s32.totalorder %s20, 1
      %p154 = por %p152, %p153
      %p156 = scmp.ne.s32.totalorder %s141, %s155
      %p157 = scmp.eq.s32.totalorder %s20, 0
      %p158 = por %p156, %p157
      %s159 = ssub.s32 %s21, %s33
      %p160 = scmp.eq.s32.totalorder %s159, 0
      %s162 = sadd.s32 %s161, 1
      %s163 = scalar_select %p160, %s161, %s162
      %p166 = pneg %p160
      %p167 = scmp.eq.s32.totalorder %s14, 1
      %p168 = por %p166, %p167
      %p169 = scmp.ne.s32.totalorder %s161, %s164
      %p170 = scmp.eq.s32.totalorder %s14, 0
      %p171 = por %p169, %p170
      %p172 = scmp.ne.s32.totalorder %s161, %s164
      %p173 = scmp.eq.s32.totalorder %s19, 1
      %p174 = por %p172, %p173
      %p175 = scmp.ne.s32.totalorder %s164, %s165
      %p176 = scmp.eq.s32.totalorder %s19, 0
      %p177 = por %p175, %p176
      %p178 = scmp.ne.s32.totalorder %s164, %s165
      %p179 = scmp.eq.s32.totalorder %s20, 1
      %p180 = por %p178, %p179
      %p182 = scmp.ne.s32.totalorder %s165, %s181
      %p183 = scmp.eq.s32.totalorder %s20, 0
      %p184 = por %p182, %p183
      %p185 = scmp.le.s32.totalorder 1, %s14
      %p186 = scmp.lt.s32.totalorder %s14, 3
      %p187 = pnand %p185, %p186
      %p188 = pneg %p187
      // Predicated region
      $region9: #{tpu_custom_call.1} parent=5 // pred_check
        _
      $region10: #{tpu_custom_call.1} parent=5 // pred_check_branch
        %190 = sbr.rel (%p187) target = $region12
      $region11: #{tpu_custom_call.1} parent=5 // pred_region
        %s191 = ssub.s32 %s14, 1
        // Predicated region
        $region13: #{tpu_custom_call.1} parent=11 // pred_check
          %p192 = pneg %p78
        $region14: #{tpu_custom_call.1} parent=11 // pred_check_branch
          %194 = sbr.rel (%p192) target = $region16
        $region15: #{tpu_custom_call.1} parent=11 // pred_region
          %p195 = scmp.lt.s32.totalorder %s24, 0
          %s196 = scalar_select %p195, %s24, 0
          %s197 = smul.addr %s196, 4
          %s198 = scalar_lea.vmem %s1, %s197
        $region16: #{tpu_custom_call.1} parent=11 // pred_fallthru
          _
        // Predicated region
        $region17: #{tpu_custom_call.1} parent=11 // pred_check
          %p199 = pneg %p104
        $region18: #{tpu_custom_call.1} parent=11 // pred_check_branch
          %201 = sbr.rel (%p199) target = $region20
        $region19: #{tpu_custom_call.1} parent=11 // pred_region
          %p202 = scmp.lt.s32.totalorder %s24, 0
          %s203 = scalar_select %p202, %s24, 0
          %s204 = scalar_lea.vmem %s2, %s203
        $region20: #{tpu_custom_call.1} parent=11 // pred_fallthru
          _
        // Predicated region
        $region21: #{tpu_custom_call.1} parent=11 // pred_check
          %p205 = pneg %p130
        $region22: #{tpu_custom_call.1} parent=11 // pred_check_branch
          %207 = sbr.rel (%p205) target = $region24
        $region23: #{tpu_custom_call.1} parent=11 // pred_region
          %s208 = smul.u32 16, %s24
          %p209 = scmp.lt.s32.totalorder %s208, 15
          %s210 = scalar_select %p209, %s208, 15
          %s211 = smul.addr %s210, 4
          %s212 = scalar_lea.vmem %s3, %s211
          %s213 = smul.u32 16, %s24
        $region24: #{tpu_custom_call.1} parent=11 // pred_fallthru
          _
        // Predicated region
        $region25: #{tpu_custom_call.1} parent=11 // pred_check
          %p214 = pneg %p151
        $region26: #{tpu_custom_call.1} parent=11 // pred_check_branch
          %216 = sbr.rel (%p214) target = $region28
        $region27: #{tpu_custom_call.1} parent=11 // pred_region
          _
        $region28: #{tpu_custom_call.1} parent=11 // pred_fallthru
          _
      $region12: #{tpu_custom_call.1} parent=5 // pred_fallthru
        _
      %p217 = scmp.lt.s32.totalorder %s14, 2
      // Predicated region
      $region29: #{tpu_custom_call.1} parent=5 // pred_check
        %p218 = pneg %p217
      $region30: #{tpu_custom_call.1} parent=5 // pred_check_branch
        %220 = sbr.rel (%p218) target = $region32
      $region31: #{tpu_custom_call.1} parent=5 // pred_region
        // Predicated region
        $region33: #{tpu_custom_call.1} parent=31 // pred_check
          %p221 = pneg %p46
        $region34: #{tpu_custom_call.1} parent=31 // pred_check_branch
          %223 = sbr.rel (%p221) target = $region36
        $region35: #{tpu_custom_call.1} parent=31 // pred_region
          %p224 = scmp.lt.s32.totalorder %s21, 1
          %s225 = scalar_select %p224, %s21, 1
          %s226 = smul.addr %s225, 4
          %s227 = scalar_lea.vmem %s0, %s226
        $region36: #{tpu_custom_call.1} parent=31 // pred_fallthru
          _
      $region32: #{tpu_custom_call.1} parent=5 // pred_fallthru
        _
      %p228 = scmp.le.s32.totalorder 1, %s14
      %p229 = scmp.lt.s32.totalorder %s14, 3
      %p230 = pnand %p228, %p229
      %p231 = pneg %p230
      // Predicated region
      $region37: #{tpu_custom_call.1} parent=5 // pred_check
        _
      $region38: #{tpu_custom_call.1} parent=5 // pred_check_branch
        %233 = sbr.rel (%p230) target = $region40
      $region39: #{tpu_custom_call.1} parent=5 // pred_region
        %s234 = ssub.s32 %s14, 1
        %p235 = scmp.lt.s32.totalorder %s23, 1
        %s236 = scalar_select %p235, %s23, 1
        %s237 = smul.addr %s236, 4
        %s238 = scalar_lea.vmem %s0, %s237
        %p239 = pneg %p52
        %p240 = pneg %p49
        %p241 = scmp.lt.s32.totalorder %s24, 0
        %s242 = scalar_select %p241, %s24, 0
        %s243 = smul.addr %s242, 4
        %s244 = scalar_lea.vmem %s1, %s243
        %p245 = pneg %p78
        %p246 = pneg %p75
        %p247 = scmp.lt.s32.totalorder %s24, 0
        %s248 = scalar_select %p247, %s24, 0
        %s249 = scalar_lea.vmem %s2, %s248
        %p250 = pneg %p104
        %p251 = pneg %p101
        %s252 = smul.u32 16, %s24
        %p253 = scmp.lt.s32.totalorder %s252, 15
        %s254 = scalar_select %p253, %s252, 15
        %s255 = smul.addr %s254, 4
        %s256 = scalar_lea.vmem %s3, %s255
        %p257 = pneg %p130
        %p258 = pneg %p127
        %p259 = pneg %p151
        %p260 = pneg %p148
        %p261 = pneg %p177
        %p262 = pneg %p174
        %s263 = sand.u32 %s164, 1
        %s264 = scalar_lea.sflag [#allocation3], %s263
        %s265 = sand.u32 %s164, 1
        %s266 = smul.addr %s265, 8
        %s267 = scalar_lea.vmem [#allocation2], %s266
        %p268 = scmp.lt.s32.totalorder %s23, 1
        %s269 = scalar_select %p268, %s23, 1
        %s270 = smul.addr %s269, 4
        %s271 = scalar_lea.vmem %s0, %s270
        %p272 = scmp.lt.s32.totalorder %s24, 0
        %s273 = scalar_select %p272, %s24, 0
        %s274 = smul.addr %s273, 4
        %s275 = scalar_lea.vmem %s1, %s274
        %p276 = scmp.lt.s32.totalorder %s24, 0
        %s277 = scalar_select %p276, %s24, 0
        %s278 = scalar_lea.vmem %s2, %s277
        %s279 = smul.u32 16, %s24
        %p280 = scmp.lt.s32.totalorder %s279, 15
        %s281 = scalar_select %p280, %s279, 15
        %s282 = smul.addr %s281, 4
        %s283 = scalar_lea.vmem %s3, %s282
        %s284 = smul.u32 16, %s24
        %p286 = scmp.eq.s32.totalorder %s24, 0
        // Predicated region
        $region41: #{tpu_custom_call.1} parent=39 // pred_check
          %p287 = pneg %p286
        $region42: #{tpu_custom_call.1} parent=39 // pred_check_branch
          %289 = sbr.rel (%p287) target = $region44
        $region43: #{tpu_custom_call.1} parent=39 // pred_region
          %v290 = vld [vmem:[%s4] sm:$0x1]
          %v292 = vlaneseq
          %v293 = vshrl.u32 %v292, 7
          %v294 = vsub.s32 0, %v293
          %v295 = vrot.slane %v290, %v294
          %vm297 = vcmask 261120
          %298 = vst.msk [vmem:[%s267] sm:$0xff] %vm297, %v295
        $region44: #{tpu_custom_call.1} parent=39 // pred_fallthru
          _
        %v299 = vld [vmem:[%s271] sm:$0xf]
        %v300 = vld [vmem:[%s275] sm:$0xf]
        %v301 = vld [vmem:[%s275 + $0x4] sm:$0xf]
        %v302 = vld [vmem:[%s275 + $0x8] sm:$0xf]
        %v303 = vld [vmem:[%s275 + $0xc] sm:$0xf]
        %v304 = vld [vmem:[%s278] sm:$0x1]
        %v306 = vlaneseq
        %v307 = vshrl.u32 %v306, 7
        %v308 = vsub.s32 0, %v307
        %v309 = vrot.slane %v304, %v308
        %v315 = vunpack.c.l.b16 %v300
        %v316 = vunpack.c.l.b16 %v301
        %v317 = vunpack.c.l.b16 %v302
        %v318 = vunpack.c.l.b16 %v303
        %v319 = vpack.c.b16 %v316, %v315
        %v320 = vpack.c.b16 %v318, %v317
        %vm323 = vcmask 261120
        %v325 = vsel %vm323, %v299, 0
        %327 = vmatprep.subr.bf16.mxu0 0
        %328 = vmatpush1.bf16.msra.mxu0 0
        %329 = vmatprep.subr.bf16.mxu0 0
        %330 = vmatpush1.bf16.msra.mxu0 0
        %331 = vmatprep.subr.bf16.mxu0 0
        %332 = vmatpush1.bf16.msra.mxu0 0
        %333 = vmatprep.subr.bf16.mxu0 0
        %334 = vmatpush1.bf16.msra.mxu0 0
        %335 = vmatprep.subr.bf16.mxu0 0
        %336 = vmatpush1.bf16.msra.mxu0 0
        %337 = vmatprep.subr.bf16.mxu0 0
        %338 = vmatpush1.bf16.msra.mxu0 0
        %339 = vmatprep.subr.bf16.mxu0 0
        %340 = vmatpush1.bf16.msra.mxu0 %v320
        %341 = vmatprep.subr.bf16.mxu0 0
        %342 = vmatpush1.bf16.msra.mxu0 %v319
        %343 = vmatprep.subr.bf16.mxu0 0
        %344 = vmatpush2.bf16.msra.mxu0 0
        %345 = vmatprep.subr.bf16.mxu0 0
        %346 = vmatpush2.bf16.msra.mxu0 0
        %347 = vmatprep.subr.bf16.mxu0 0
        %348 = vmatpush2.bf16.msra.mxu0 0
        %349 = vmatprep.subr.bf16.mxu0 0
        %350 = vmatpush2.bf16.msra.mxu0 0
        %351 = vmatprep.subr.bf16.mxu0 0
        %352 = vmatpush2.bf16.msra.mxu0 0
        %353 = vmatprep.subr.bf16.mxu0 0
        %354 = vmatpush2.bf16.msra.mxu0 0
        %355 = vmatprep.subr.bf16.mxu0 0
        %356 = vmatpush2.bf16.msra.mxu0 0
        %357 = vmatprep.subr.bf16.mxu0 0
        %358 = vmatpush2.bf16.msra.mxu0 0
        %359 = vmatprep.mubr.bf16.mxu0 0
        %360 = vmatmul.mubr.bf16.gmra.mxu0 %v325
        %v361 = vpop.f32.mrf.mxu0
        %v362 = vadd.f32 %v309, %v361
        %v363 = vpop.f32.mrf.mxu0
        %v364 = vpop.f32.mrf.mxu0
        %v365 = vpop.f32.mrf.mxu0
        %366 = vdwg.mxu0
        %v367 = vmul.f32 %v362, %v362
        %v368 = vmul.f32 %v367, 0.044715
        %v369 = vadd.f32 %v368, 1.0
        %v370 = vmul.f32 %v362, %v369
        %v371 = vmul.f32 %v370, 1.5957692
        %v372 = vxor.u32 %v371, 2147483648
        %v373 = vmul.f32 %v372, 1.442695
        %v374 = vpow.pop %v373
        %v375 = vadd.f32 %v374, 1.0
        %v376 = vrcp.pop %v375
        %v377 = vmul.f32 1.0, %v376
        %v378 = vmul.f32 %v362, %v377
        %v379 = vld [vmem:[%s267] sm:$0xff]
        %v380 = vpack.c.bf16 %v378, %v378
        %v381 = vld [vmem:[%s283] sm:$0xf]
        %v382 = vld [vmem:[%s283 + $0x4] sm:$0xf]
        %v383 = vld [vmem:[%s283 + $0x8] sm:$0xf]
        %v384 = vld [vmem:[%s283 + $0xc] sm:$0xf]
        %v385 = vld [vmem:[%s283 + $0x10] sm:$0xf]
        %v386 = vld [vmem:[%s283 + $0x14] sm:$0xf]
        %v387 = vld [vmem:[%s283 + $0x18] sm:$0xf]
        %v388 = vld [vmem:[%s283 + $0x1c] sm:$0xf]
        %v389 = vld [vmem:[%s283 + $0x20] sm:$0xf]
        %v390 = vld [vmem:[%s283 + $0x24] sm:$0xf]
        %v391 = vld [vmem:[%s283 + $0x28] sm:$0xf]
        %v392 = vld [vmem:[%s283 + $0x2c] sm:$0xf]
        %v393 = vld [vmem:[%s283 + $0x30] sm:$0xf]
        %v394 = vld [vmem:[%s283 + $0x34] sm:$0xf]
        %v395 = vld [vmem:[%s283 + $0x38] sm:$0xf]
        %v396 = vld [vmem:[%s283 + $0x3c] sm:$0xf]
        %v413 = vunpack.c.l.b16 %v381
        %v414 = vunpack.c.l.b16 %v382
        %v415 = vunpack.c.l.b16 %v383
        %v416 = vunpack.c.l.b16 %v384
        %v417 = vunpack.c.l.b16 %v385
        %v418 = vunpack.c.l.b16 %v386
        %v419 = vunpack.c.l.b16 %v387
        %v420 = vunpack.c.l.b16 %v388
        %v421 = vunpack.c.l.b16 %v389
        %v422 = vunpack.c.l.b16 %v390
        %v423 = vunpack.c.l.b16 %v391
        %v424 = vunpack.c.l.b16 %v392
        %v425 = vunpack.c.l.b16 %v393
        %v426 = vunpack.c.l.b16 %v394
        %v427 = vunpack.c.l.b16 %v395
        %v428 = vunpack.c.l.b16 %v396
        %v429 = vpack.c.b16 %v414, %v413
        %v430 = vpack.c.b16 %v416, %v415
        %v431 = vpack.c.b16 %v418, %v417
        %v432 = vpack.c.b16 %v420, %v419
        %v433 = vpack.c.b16 %v422, %v421
        %v434 = vpack.c.b16 %v424, %v423
        %v435 = vpack.c.b16 %v426, %v425
        %v436 = vpack.c.b16 %v428, %v427
        %445 = vmatprep.subr.bf16.mxu0 0
        %446 = vmatpush1.bf16.msra.mxu0 %v436
        %447 = vmatprep.subr.bf16.mxu0 0
        %448 = vmatpush1.bf16.msra.mxu0 %v435
        %449 = vmatprep.subr.bf16.mxu0 0
        %450 = vmatpush1.bf16.msra.mxu0 %v434
        %451 = vmatprep.subr.bf16.mxu0 0
        %452 = vmatpush1.bf16.msra.mxu0 %v433
        %453 = vmatprep.subr.bf16.mxu0 0
        %454 = vmatpush1.bf16.msra.mxu0 %v432
        %455 = vmatprep.subr.bf16.mxu0 0
        %456 = vmatpush1.bf16.msra.mxu0 %v431
        %457 = vmatprep.subr.bf16.mxu0 0
        %458 = vmatpush1.bf16.msra.mxu0 %v430
        %459 = vmatprep.subr.bf16.mxu0 0
        %460 = vmatpush1.bf16.msra.mxu0 %v429
        %461 = vmatprep.subr.bf16.mxu0 0
        %462 = vmatpush2.bf16.msra.mxu0 0
        %463 = vmatprep.subr.bf16.mxu0 0
        %464 = vmatpush2.bf16.msra.mxu0 0
        %465 = vmatprep.subr.bf16.mxu0 0
        %466 = vmatpush2.bf16.msra.mxu0 0
        %467 = vmatprep.subr.bf16.mxu0 0
        %468 = vmatpush2.bf16.msra.mxu0 0
        %469 = vmatprep.subr.bf16.mxu0 0
        %470 = vmatpush2.bf16.msra.mxu0 0
        %471 = vmatprep.subr.bf16.mxu0 0
        %472 = vmatpush2.bf16.msra.mxu0 0
        %473 = vmatprep.subr.bf16.mxu0 0
        %474 = vmatpush2.bf16.msra.mxu0 0
        %475 = vmatprep.subr.bf16.mxu0 0
        %476 = vmatpush2.bf16.msra.mxu0 0
        %477 = vmatprep.mubr.bf16.mxu0 0
        %478 = vmatmul.mubr.bf16.gmra.mxu0 %v380
        %v479 = vpop.f32.mrf.mxu0
        %v480 = vadd.f32 0.0, %v479
        %v481 = vpop.f32.mrf.mxu0
        %v482 = vpop.f32.mrf.mxu0
        %v483 = vpop.f32.mrf.mxu0
        %484 = vdwg.mxu0
        %v485 = vadd.f32 %v379, %v480
        %486 = vst.msk [vmem:[%s267] sm:$0xff] %vm323, %v485
        %s487 = sand.u32 %s164, 1
        %s488 = scalar_lea.sflag [#allocation3], %s487
        %s489 = sand.u32 %s164, 1
        %s490 = smul.addr %s489, 8
        %s491 = scalar_lea.vmem [#allocation2], %s490
        // Predicated region
        $region45: #{tpu_custom_call.1} parent=39 // pred_check
          %p492 = pneg %p174
        $region46: #{tpu_custom_call.1} parent=39 // pred_check_branch
          %494 = sbr.rel (%p492) target = $region48
        $region47: #{tpu_custom_call.1} parent=39 // pred_region
          %s496 = ssub.s32 128, 128
          %497 = vsyncadd %s488, %s496
          %s498 = smul.addr %s23, 128
          %s499 = scalar_lea.hbm %s5, %s498
          %s501 = sshll.u32 %s491, 4
          %s502 = int_to_ptr.vmem [resolvable:$true] %s501
          %504 = dma.vmem_to_hbm [thread:$0]  %s502, 128, %s499, %s488
        $region48: #{tpu_custom_call.1} parent=39 // pred_fallthru
          _
      $region40: #{tpu_custom_call.1} parent=5 // pred_fallthru
        _
      %p505 = scmp.le.s32.totalorder 2, %s14
      // Predicated region
      $region49: #{tpu_custom_call.1} parent=5 // pred_check
        %p506 = pneg %p505
      $region50: #{tpu_custom_call.1} parent=5 // pred_check_branch
        %508 = sbr.rel (%p506) target = $region52
      $region51: #{tpu_custom_call.1} parent=5 // pred_region
        %s509 = ssub.s32 %s14, 2
        // Predicated region
        $region53: #{tpu_custom_call.1} parent=51 // pred_check
          %p510 = pneg %p180
        $region54: #{tpu_custom_call.1} parent=51 // pred_check_branch
          %512 = sbr.rel (%p510) target = $region56
        $region55: #{tpu_custom_call.1} parent=51 // pred_region
          %s513 = sand.u32 %s165, 1
          %s514 = scalar_lea.sflag [#allocation3], %s513
          %s515 = sand.u32 %s165, 1
          %s516 = smul.addr %s515, 8
          %s517 = scalar_lea.vmem [#allocation2], %s516
          %518 = dma.done %s514, 128
        $region56: #{tpu_custom_call.1} parent=51 // pred_fallthru
          _
      $region52: #{tpu_custom_call.1} parent=5 // pred_fallthru
        _
    $region6: #{tpu_custom_call.1} parent=1 // loop_footer
      %s18 = sadd.s32 1, %s14
    $region7: #{tpu_custom_call.1} parent=1 // loop_footer_branch
      %13 = sbr.rel target = $region3
    $region8: #{tpu_custom_call.1} parent=1 // loop_exit
      _
    %519 = vsyncpa [#allocation3], 1
    %s520 = scalar_lea.sflag [#allocation3], 1
    %521 = vsyncpa %s520, 1

</llo_original>
